<compile_context>
chip_gen: v5e
topology: v5e:2x2
jax: 0.10.0
libtpu: 0.0.40
codegen_flags: <defaults>
</compile_context>

<pallas_src>
import jax
import jax.numpy as jnp
from jax.experimental import pallas as pl
from jax.experimental.pallas import tpu as pltpu


def _se_kernel(x_ref, w1t_ref, b1_ref, a_ref, w2t_ref, b2_ref, o_ref):
    # x_ref: (1, C, HW)  lane-dense   w1t_ref: (C, R)   b1_ref: (1, R)
    # a_ref: (1, 1) in SMEM (PReLU slope)
    # w2t_ref: (R, C)    b2_ref: (1, C)    o_ref: (1, C, HW)
    x = x_ref[...]                                          # native dtype (no f32 slab copy)
    hw = x_ref.shape[-1]
    inv_hw = jnp.float32(1.0 / hw)

    # --- squeeze: per-channel spatial mean, accumulated in f32 -> (1, C)
    y = jnp.sum(x.astype(jnp.float32), axis=-1) * inv_hw    # (1, C)

    # --- excitation: fc1 -> PReLU -> fc2 -> sigmoid (all tiny, f32)
    h = jnp.dot(y, w1t_ref[...], preferred_element_type=jnp.float32) + b1_ref[...]   # (1, R)
    a = a_ref[0, 0]
    h = jnp.where(h >= 0, h, a * h)                          # PReLU (single shared slope)
    z = jnp.dot(h, w2t_ref[...], preferred_element_type=jnp.float32) + b2_ref[...]   # (1, C)
    s = jax.nn.sigmoid(z)                                    # (1, C) f32

    # --- scale: broadcast gate over the lane (spatial) axis, multiply in x's dtype
    o_ref[...] = (x * s.astype(x.dtype)[:, :, None]).astype(o_ref.dtype)


def se_layer(x, w1, b1, prelu_a, w2, b2):
    """SELayer forward.

    x : (B, C, H, W)
    w1: (R, C), b1: (R,)       -- nn.Linear(channel, reduction)
    prelu_a: scalar            -- nn.PReLU() single shared parameter
    w2: (C, R), b2: (C,)       -- nn.Linear(reduction, channel)
    """
    B, C, H, W = x.shape
    R = w1.shape[0]
    HW = H * W

    # Lane-dense layout: flatten spatial dims (free for contiguous NCHW).
    x3 = x.reshape(B, C, HW)

    # Glue: pre-transpose weights / reshape biases so the kernel does plain
    # row-major matmuls with no in-kernel transposes.
    w1t = jnp.asarray(w1, jnp.float32).T                     # (C, R)
    w2t = jnp.asarray(w2, jnp.float32).T                     # (R, C)
    b1r = jnp.asarray(b1, jnp.float32).reshape(1, R)
    b2r = jnp.asarray(b2, jnp.float32).reshape(1, C)
    a2d = jnp.asarray(prelu_a, jnp.float32).reshape(1, 1)

    # Raise the scoped-VMEM limit only if one double-buffered slab (in + out)
    # plus weights would exceed the 32 MiB default.
    slab_bytes = C * HW * x.dtype.itemsize
    needed = 4 * slab_bytes + (1 << 20)                      # 2x in + 2x out + headroom
    vmem_limit = needed if needed > (32 << 20) else None

    out3 = pl.pallas_call(
        _se_kernel,
        out_shape=jax.ShapeDtypeStruct((B, C, HW), x.dtype),
        grid_spec=pltpu.PrefetchScalarGridSpec(
            num_scalar_prefetch=0,
            grid=(B,),
            in_specs=[
                pl.BlockSpec((1, C, HW), lambda b: (b, 0, 0)),
                pl.BlockSpec((C, R), lambda b: (0, 0)),
                pl.BlockSpec((1, R), lambda b: (0, 0)),
                pl.BlockSpec((1, 1), lambda b: (0, 0),
                             memory_space=pltpu.MemorySpace.SMEM),
                pl.BlockSpec((R, C), lambda b: (0, 0)),
                pl.BlockSpec((1, C), lambda b: (0, 0)),
            ],
            out_specs=pl.BlockSpec((1, C, HW), lambda b: (b, 0, 0)),
        ),
        compiler_params=pltpu.CompilerParams(
            dimension_semantics=("parallel",),
            vmem_limit_bytes=vmem_limit),
    )(x3, w1t, b1r, a2d, w2t, b2r)

    return out3.reshape(B, C, H, W)


def se_layer_ref(x, w1, b1, prelu_a, w2, b2):
    """Pure-JAX reference mirroring the PyTorch forward."""
    y = jnp.mean(x, axis=(2, 3))                             # (B, C)
    h = y @ w1.T + b1
    h = jnp.where(h >= 0, h, prelu_a * h)
    z = h @ w2.T + b2
    s = jax.nn.sigmoid(z)
    return x * s[:, :, None, None]


if __name__ == "__main__":
    B, C, H, W = 2, 4, 16, 16
    REDUCTION = 16

    key = jax.random.PRNGKey(0)
    kx, kw1, kb1, kw2, kb2 = jax.random.split(key, 5)

    x = jax.random.normal(kx, (B, C, H, W), dtype=jnp.float32)

    # Deterministic parameter init (synthetic; shapes match the nn.Linear layers).
    w1 = jax.random.uniform(kw1, (REDUCTION, C), jnp.float32, -0.5, 0.5)
    b1 = jax.random.uniform(kb1, (REDUCTION,), jnp.float32, -0.5, 0.5)
    w2 = jax.random.uniform(kw2, (C, REDUCTION), jnp.float32, -0.25, 0.25)
    b2 = jax.random.uniform(kb2, (C,), jnp.float32, -0.25, 0.25)
    prelu_a = jnp.float32(0.25)   # nn.PReLU() default init

    out = se_layer(x, w1, b1, prelu_a, w2, b2)
    out = jax.block_until_ready(out)

    ref = se_layer_ref(x, w1, b1, prelu_a, w2, b2)
    assert out.shape == (B, C, H, W)
    assert jnp.allclose(out, ref, atol=1e-5, rtol=1e-5), "mismatch vs reference"

    print("KERNEL_OK")
</pallas_src>

<mosaic_0001>
module attributes {stable_mosaic.version = 11 : i64} {
  func.func @_se_kernel(%arg0: i32, %arg1: memref<1x4x256xf32, #tpu.memory_space<vmem>>, %arg2: memref<4x16xf32, #tpu.memory_space<vmem>>, %arg3: memref<1x16xf32, #tpu.memory_space<vmem>>, %arg4: memref<1x1xf32, #tpu.memory_space<smem>>, %arg5: memref<16x4xf32, #tpu.memory_space<vmem>>, %arg6: memref<1x4xf32, #tpu.memory_space<vmem>>, %arg7: memref<1x4x256xf32, #tpu.memory_space<vmem>>) attributes {dimension_semantics = [#tpu.dimension_semantics<parallel>], iteration_bounds = array<i64: 2>, scalar_prefetch = 0 : i64, scratch_operands = 0 : i64, tpu.core_type = #tpu.core_type<tc>, window_params = [{transform_indices = @transform_0, window_bounds = array<i64: 1, 4, 256>}, {pipeline_mode = #tpu.pipeline_mode<synchronous>, transform_indices = @transform_1, window_bounds = array<i64: 4, 16>}, {pipeline_mode = #tpu.pipeline_mode<synchronous>, transform_indices = @transform_2, window_bounds = array<i64: 1, 16>}, {transform_indices = @transform_3, window_bounds = array<i64: 1, 1>}, {pipeline_mode = #tpu.pipeline_mode<synchronous>, transform_indices = @transform_4, window_bounds = array<i64: 16, 4>}, {pipeline_mode = #tpu.pipeline_mode<synchronous>, transform_indices = @transform_5, window_bounds = array<i64: 1, 4>}, {transform_indices = @transform_6, window_bounds = array<i64: 1, 4, 256>}]} {
    %c0 = arith.constant 0 : index
    %c0_0 = arith.constant 0 : index
    %c0_1 = arith.constant 0 : index
    %0 = vector.load %arg1[%c0, %c0_0, %c0_1] : memref<1x4x256xf32, #tpu.memory_space<vmem>>, vector<1x4x256xf32>
    %cst = arith.constant dense<0.000000e+00> : vector<1x4xf32>
    %1 = vector.multi_reduction <add>, %0, %cst [2] : vector<1x4x256xf32> to vector<1x4xf32>
    %cst_2 = arith.constant 3.906250e-03 : f32
    %2 = vector.broadcast %cst_2 : f32 to vector<1x4xf32>
    %3 = arith.mulf %1, %2 : vector<1x4xf32>
    %c0_3 = arith.constant 0 : index
    %c0_4 = arith.constant 0 : index
    %4 = vector.load %arg2[%c0_3, %c0_4] : memref<4x16xf32, #tpu.memory_space<vmem>>, vector<4x16xf32>
    %cst_5 = arith.constant dense<0.000000e+00> : vector<1x16xf32>
    %5 = tpu.matmul %3, %4, %cst_5 {dimension_numbers = #tpu.dot_dimension_numbers<[1], [0], [0], [1], [0, 0, 1, 1], [], []>} : vector<1x4xf32>, vector<4x16xf32>, vector<1x16xf32> -> vector<1x16xf32>
    %c0_6 = arith.constant 0 : index
    %c0_7 = arith.constant 0 : index
    %6 = vector.load %arg3[%c0_6, %c0_7] : memref<1x16xf32, #tpu.memory_space<vmem>>, vector<1x16xf32>
    %7 = arith.addf %5, %6 : vector<1x16xf32>
    %c0_8 = arith.constant 0 : index
    %c0_9 = arith.constant 0 : index
    %8 = memref.load %arg4[%c0_8, %c0_9] : memref<1x1xf32, #tpu.memory_space<smem>>
    %cst_10 = arith.constant 0.000000e+00 : f32
    %9 = vector.broadcast %cst_10 : f32 to vector<1x16xf32>
    %10 = arith.cmpf oge, %7, %9 : vector<1x16xf32>
    %11 = vector.broadcast %8 : f32 to vector<1x16xf32>
    %12 = arith.mulf %11, %7 : vector<1x16xf32>
    %13 = arith.select %10, %7, %12 : vector<1x16xi1>, vector<1x16xf32>
    %c0_11 = arith.constant 0 : index
    %c0_12 = arith.constant 0 : index
    %14 = vector.load %arg5[%c0_11, %c0_12] : memref<16x4xf32, #tpu.memory_space<vmem>>, vector<16x4xf32>
    %cst_13 = arith.constant dense<0.000000e+00> : vector<1x4xf32>
    %15 = tpu.matmul %13, %14, %cst_13 {dimension_numbers = #tpu.dot_dimension_numbers<[1], [0], [0], [1], [0, 0, 1, 1], [], []>} : vector<1x16xf32>, vector<16x4xf32>, vector<1x4xf32> -> vector<1x4xf32>
    %c0_14 = arith.constant 0 : index
    %c0_15 = arith.constant 0 : index
    %16 = vector.load %arg6[%c0_14, %c0_15] : memref<1x4xf32, #tpu.memory_space<vmem>>, vector<1x4xf32>
    %17 = arith.addf %15, %16 : vector<1x4xf32>
    %18 = arith.negf %17 : vector<1x4xf32>
    %19 = math.exp %18 : vector<1x4xf32>
    %cst_16 = arith.constant 1.000000e+00 : f32
    %20 = vector.broadcast %cst_16 : f32 to vector<1x4xf32>
    %21 = arith.addf %20, %19 : vector<1x4xf32>
    %22 = arith.divf %20, %21 : vector<1x4xf32>
    %23 = vector.shape_cast %22 : vector<1x4xf32> to vector<1x4x1xf32>
    %24 = vector.broadcast %23 : vector<1x4x1xf32> to vector<1x4x256xf32>
    %25 = arith.mulf %0, %24 : vector<1x4x256xf32>
    %c0_17 = arith.constant 0 : index
    %c0_18 = arith.constant 0 : index
    %c0_19 = arith.constant 0 : index
    %26 = vector.load %arg7[%c0_17, %c0_18, %c0_19] : memref<1x4x256xf32, #tpu.memory_space<vmem>>, vector<1x4x256xf32>
    tpu.vector_store %arg7[%c0_17, %c0_18, %c0_19], %25 {strides = array<i32>} : memref<1x4x256xf32, #tpu.memory_space<vmem>>, vector<1x4x256xf32>,
    return
  }
  func.func @transform_0(%arg0: i32) -> (i32, i32, i32) {
    %c0_i32 = arith.constant 0 : i32
    %c0_i32_0 = arith.constant 0 : i32
    %c0_i32_1 = arith.constant 0 : i32
    return %arg0, %c0_i32, %c0_i32_0 : i32, i32, i32
  }
  func.func @transform_1(%arg0: i32) -> (i32, i32) {
    %c0_i32 = arith.constant 0 : i32
    %c0_i32_0 = arith.constant 0 : i32
    %c0_i32_1 = arith.constant 0 : i32
    return %c0_i32, %c0_i32_0 : i32, i32
  }
  func.func @transform_2(%arg0: i32) -> (i32, i32) {
    %c0_i32 = arith.constant 0 : i32
    %c0_i32_0 = arith.constant 0 : i32
    %c0_i32_1 = arith.constant 0 : i32
    return %c0_i32, %c0_i32_0 : i32, i32
  }
  func.func @transform_3(%arg0: i32) -> (i32, i32) {
    %c0_i32 = arith.constant 0 : i32
    %c0_i32_0 = arith.constant 0 : i32
    %c0_i32_1 = arith.constant 0 : i32
    return %c0_i32, %c0_i32_0 : i32, i32
  }
  func.func @transform_4(%arg0: i32) -> (i32, i32) {
    %c0_i32 = arith.constant 0 : i32
    %c0_i32_0 = arith.constant 0 : i32
    %c0_i32_1 = arith.constant 0 : i32
    return %c0_i32, %c0_i32_0 : i32, i32
  }
  func.func @transform_5(%arg0: i32) -> (i32, i32) {
    %c0_i32 = arith.constant 0 : i32
    %c0_i32_0 = arith.constant 0 : i32
    %c0_i32_1 = arith.constant 0 : i32
    return %c0_i32, %c0_i32_0 : i32, i32
  }
  func.func @transform_6(%arg0: i32) -> (i32, i32, i32) {
    %c0_i32 = arith.constant 0 : i32
    %c0_i32_0 = arith.constant 0 : i32
    %c0_i32_1 = arith.constant 0 : i32
    return %arg0, %c0_i32, %c0_i32_0 : i32, i32, i32
  }
}

</mosaic_0001>

<llo_original>
// kernel: tpu_custom_call.1
$region0: #{tpu_custom_call.1}
  #allocation0 [shape = 'u32[]', space=smem, size = 0x4, offset = 0x4, fixed_abs, tag = 'smem constant byte address 0x4 - core index']
  #allocation1 [shape = 'u32[72,128]{1,0:T(1,128)}', space=vmem, size = 0x9000, scoped, tag = 'internal scratch']
  #allocation2 [shape = 'f32[1,1]{1,0:T(1,128)S(6)}', space=smem, size = 0x200, scoped, tag = 'scoped memory for tpu_custom_call.1']
  %s0 = inlined_call_operand.vmem [shape: f32[2,4,256], index: 0, kind: input, shape index: {}]
  %s1 = inlined_call_operand.vmem [shape: f32[4,16], index: 1, kind: input, shape index: {}]
  %s2 = inlined_call_operand.hbm [shape: f32[1,16], index: 2, kind: input, shape index: {}]
  %s3 = inlined_call_operand.<no memory space> [shape: f32[1,1], index: 3, kind: input, shape index: {}]
  %s4 = inlined_call_operand.vmem [shape: f32[16,4], index: 4, kind: input, shape index: {}]
  %s5 = inlined_call_operand.vmem [shape: f32[1,4], index: 5, kind: input, shape index: {}]
  %s6 = inlined_call_operand.hbm [shape: f32[2,4,256], index: 6, kind: output, shape index: {}]
  %s7 = sld [smem:[#allocation0]]
  $region61: #{tpu_custom_call.1} parent=0
    _
  %s9 = ssub.s32 1, %s7
  %s10 = scalar_select 0, %s9, %s7
  %11 = sst [smem:[#allocation2]] %s3
  $region1: #{tpu_custom_call.1} parent=0
    #allocation3 [shape = 'u8[512]{0}', space=vmem, size = 0x400, scoped, tag = 'input window, operand 2, single buffered']
    #allocation4 [shape = 's32[2]{0}', space=sflag, size = 0x8, scoped, tag = 'scoped memory for tpu_custom_call.1']
    #allocation5 [shape = 's32[2]{0}', space=sflag, size = 0x8, scoped, tag = 'scoped memory for tpu_custom_call.1']
    #allocation6 [shape = 'u8[8192]{0}', space=vmem, size = 0x2000, scoped, tag = 'output window, operand 0']
    %12 = vsyncpa [#allocation4], 0
    %13 = vsyncpa [#allocation5], 0
    %s14 = scalar_lea.sflag [#allocation5], 1
    %15 = vsyncpa %s14, 0
    loop: start=0, step=1, limit=4
    $region2: #{tpu_custom_call.1} parent=1 // loop_pre_header
      _
    $region3: #{tpu_custom_call.1} parent=1 // loop_header
      %s17 = sphi 0, %s21
      %p18 = scmp.ge.s32.totalorder %s17, 4
      %s27 = sphi 0, %s29
      %s30 = sphi 0, %s27
      %s31 = sphi 0, %s30
      %s47 = sphi 0, %s31
      %s51 = sphi 0, %s51
      %s53 = sphi 0, %s51
      %s54 = sphi 0, %s53
      %s68 = sphi 0, %s54
      %s72 = sphi 0, %s72
      %s74 = sphi 0, %s72
      %s75 = sphi 0, %s74
      %s89 = sphi 0, %s75
      %s93 = sphi 0, %s93
      %s95 = sphi 0, %s93
      %s96 = sphi 0, %s95
      %s110 = sphi 0, %s96
      %s114 = sphi 0, %s114
      %s116 = sphi 0, %s114
      %s117 = sphi 0, %s116
      %s131 = sphi 0, %s117
      %s135 = sphi 0, %s135
      %s137 = sphi 0, %s135
      %s138 = sphi 0, %s137
      %s152 = sphi 0, %s138
      %s158 = sphi 0, %s160
      %s161 = sphi 0, %s158
      %s162 = sphi 0, %s161
      %s178 = sphi 0, %s162
    $region4: #{tpu_custom_call.1} parent=1 // loop_header_branch
      %20 = sbr.rel (%p18) target = $region8
    $region5: #{tpu_custom_call.1} parent=1 // loop_body
      %s22 = ssub.s32 %s17, 1
      %s23 = ssub.s32 %s17, 2
      %s24 = sadd.s32 %s17, 1
      %s25 = ssub.s32 %s17, %s24
      %p26 = scmp.eq.s32.totalorder %s25, 0
      %s28 = sadd.s32 %s27, 1
      %s29 = scalar_select %p26, %s27, %s28
      %p32 = pneg %p26
      %p33 = scmp.eq.s32.totalorder %s17, 1
      %p34 = por %p32, %p33
      %p35 = scmp.ne.s32.totalorder %s27, %s30
      %p36 = scmp.eq.s32.totalorder %s17, 0
      %p37 = por %p35, %p36
      %p38 = scmp.ne.s32.totalorder %s27, %s30
      %p39 = scmp.eq.s32.totalorder %s22, 1
      %p40 = por %p38, %p39
      %p41 = scmp.ne.s32.totalorder %s30, %s31
      %p42 = scmp.eq.s32.totalorder %s22, 0
      %p43 = por %p41, %p42
      %p44 = scmp.ne.s32.totalorder %s30, %s31
      %p45 = scmp.eq.s32.totalorder %s23, 1
      %p46 = por %p44, %p45
      %p48 = scmp.ne.s32.totalorder %s31, %s47
      %p49 = scmp.eq.s32.totalorder %s23, 0
      %p50 = por %p48, %p49
      %s52 = sadd.s32 %s51, 1
      %p55 = scmp.eq.s32.totalorder %s17, 1
      %p56 = scmp.ne.s32.totalorder %s51, %s53
      %p57 = scmp.eq.s32.totalorder %s17, 0
      %p58 = por %p56, %p57
      %p59 = scmp.ne.s32.totalorder %s51, %s53
      %p60 = scmp.eq.s32.totalorder %s22, 1
      %p61 = por %p59, %p60
      %p62 = scmp.ne.s32.totalorder %s53, %s54
      %p63 = scmp.eq.s32.totalorder %s22, 0
      %p64 = por %p62, %p63
      %p65 = scmp.ne.s32.totalorder %s53, %s54
      %p66 = scmp.eq.s32.totalorder %s23, 1
      %p67 = por %p65, %p66
      %p69 = scmp.ne.s32.totalorder %s54, %s68
      %p70 = scmp.eq.s32.totalorder %s23, 0
      %p71 = por %p69, %p70
      %s73 = sadd.s32 %s72, 1
      %p76 = scmp.eq.s32.totalorder %s17, 1
      %p77 = scmp.ne.s32.totalorder %s72, %s74
      %p78 = scmp.eq.s32.totalorder %s17, 0
      %p79 = por %p77, %p78
      %p80 = scmp.ne.s32.totalorder %s72, %s74
      %p81 = scmp.eq.s32.totalorder %s22, 1
      %p82 = por %p80, %p81
      %p83 = scmp.ne.s32.totalorder %s74, %s75
      %p84 = scmp.eq.s32.totalorder %s22, 0
      %p85 = por %p83, %p84
      %p86 = scmp.ne.s32.totalorder %s74, %s75
      %p87 = scmp.eq.s32.totalorder %s23, 1
      %p88 = por %p86, %p87
      %p90 = scmp.ne.s32.totalorder %s75, %s89
      %p91 = scmp.eq.s32.totalorder %s23, 0
      %p92 = por %p90, %p91
      %s94 = sadd.s32 %s93, 1
      %p97 = scmp.eq.s32.totalorder %s17, 1
      %p98 = scmp.ne.s32.totalorder %s93, %s95
      %p99 = scmp.eq.s32.totalorder %s17, 0
      %p100 = por %p98, %p99
      %p101 = scmp.ne.s32.totalorder %s93, %s95
      %p102 = scmp.eq.s32.totalorder %s22, 1
      %p103 = por %p101, %p102
      %p104 = scmp.ne.s32.totalorder %s95, %s96
      %p105 = scmp.eq.s32.totalorder %s22, 0
      %p106 = por %p104, %p105
      %p107 = scmp.ne.s32.totalorder %s95, %s96
      %p108 = scmp.eq.s32.totalorder %s23, 1
      %p109 = por %p107, %p108
      %p111 = scmp.ne.s32.totalorder %s96, %s110
      %p112 = scmp.eq.s32.totalorder %s23, 0
      %p113 = por %p111, %p112
      %s115 = sadd.s32 %s114, 1
      %p118 = scmp.eq.s32.totalorder %s17, 1
      %p119 = scmp.ne.s32.totalorder %s114, %s116
      %p120 = scmp.eq.s32.totalorder %s17, 0
      %p121 = por %p119, %p120
      %p122 = scmp.ne.s32.totalorder %s114, %s116
      %p123 = scmp.eq.s32.totalorder %s22, 1
      %p124 = por %p122, %p123
      %p125 = scmp.ne.s32.totalorder %s116, %s117
      %p126 = scmp.eq.s32.totalorder %s22, 0
      %p127 = por %p125, %p126
      %p128 = scmp.ne.s32.totalorder %s116, %s117
      %p129 = scmp.eq.s32.totalorder %s23, 1
      %p130 = por %p128, %p129
      %p132 = scmp.ne.s32.totalorder %s117, %s131
      %p133 = scmp.eq.s32.totalorder %s23, 0
      %p134 = por %p132, %p133
      %s136 = sadd.s32 %s135, 1
      %p139 = scmp.eq.s32.totalorder %s17, 1
      %p140 = scmp.ne.s32.totalorder %s135, %s137
      %p141 = scmp.eq.s32.totalorder %s17, 0
      %p142 = por %p140, %p141
      %p143 = scmp.ne.s32.totalorder %s135, %s137
      %p144 = scmp.eq.s32.totalorder %s22, 1
      %p145 = por %p143, %p144
      %p146 = scmp.ne.s32.totalorder %s137, %s138
      %p147 = scmp.eq.s32.totalorder %s22, 0
      %p148 = por %p146, %p147
      %p149 = scmp.ne.s32.totalorder %s137, %s138
      %p150 = scmp.eq.s32.totalorder %s23, 1
      %p151 = por %p149, %p150
      %p153 = scmp.ne.s32.totalorder %s138, %s152
      %p154 = scmp.eq.s32.totalorder %s23, 0
      %p155 = por %p153, %p154
      %s156 = ssub.s32 %s17, %s24
      %p157 = scmp.eq.s32.totalorder %s156, 0
      %s159 = sadd.s32 %s158, 1
      %s160 = scalar_select %p157, %s158, %s159
      %p163 = pneg %p157
      %p164 = scmp.eq.s32.totalorder %s17, 1
      %p165 = por %p163, %p164
      %p166 = scmp.ne.s32.totalorder %s158, %s161
      %p167 = scmp.eq.s32.totalorder %s17, 0
      %p168 = por %p166, %p167
      %p169 = scmp.ne.s32.totalorder %s158, %s161
      %p170 = scmp.eq.s32.totalorder %s22, 1
      %p171 = por %p169, %p170
      %p172 = scmp.ne.s32.totalorder %s161, %s162
      %p173 = scmp.eq.s32.totalorder %s22, 0
      %p174 = por %p172, %p173
      %p175 = scmp.ne.s32.totalorder %s161, %s162
      %p176 = scmp.eq.s32.totalorder %s23, 1
      %p177 = por %p175, %p176
      %p179 = scmp.ne.s32.totalorder %s162, %s178
      %p180 = scmp.eq.s32.totalorder %s23, 0
      %p181 = por %p179, %p180
      %p182 = scmp.le.s32.totalorder 1, %s17
      %p183 = scmp.lt.s32.totalorder %s17, 3
      %p184 = pnand %p182, %p183
      %p185 = pneg %p184
      // Predicated region
      $region9: #{tpu_custom_call.1} parent=5 // pred_check
        _
      $region10: #{tpu_custom_call.1} parent=5 // pred_check_branch
        %187 = sbr.rel (%p184) target = $region12
      $region11: #{tpu_custom_call.1} parent=5 // pred_region
        %s188 = ssub.s32 %s17, 1
        // Predicated region
        $region13: #{tpu_custom_call.1} parent=11 // pred_check
          %p189 = pneg %p64
        $region14: #{tpu_custom_call.1} parent=11 // pred_check_branch
          %191 = sbr.rel (%p189) target = $region16
        $region15: #{tpu_custom_call.1} parent=11 // pred_region
          _
        $region16: #{tpu_custom_call.1} parent=11 // pred_fallthru
          _
        // Predicated region
        $region17: #{tpu_custom_call.1} parent=11 // pred_check
          %p192 = pneg %p85
        $region18: #{tpu_custom_call.1} parent=11 // pred_check_branch
          %194 = sbr.rel (%p192) target = $region20
        $region19: #{tpu_custom_call.1} parent=11 // pred_region
          %196 = vsyncadd [#allocation4], 0
          %s198 = sshll.u32 %s2, 4
          %s199 = int_to_ptr.hbm [resolvable:$true] %s198
          %s200 = sshll.u32 [#allocation3], 4
          %s201 = int_to_ptr.vmem [resolvable:$true] %s200
          %203 = dma.hbm_to_vmem [thread:$0]  %s199, 16, %s201, [#allocation4]
        $region20: #{tpu_custom_call.1} parent=11 // pred_fallthru
          _
        // Predicated region
        $region21: #{tpu_custom_call.1} parent=11 // pred_check
          %p204 = pneg %p106
        $region22: #{tpu_custom_call.1} parent=11 // pred_check_branch
          %206 = sbr.rel (%p204) target = $region24
        $region23: #{tpu_custom_call.1} parent=11 // pred_region
          _
        $region24: #{tpu_custom_call.1} parent=11 // pred_fallthru
          _
        // Predicated region
        $region25: #{tpu_custom_call.1} parent=11 // pred_check
          %p207 = pneg %p127
        $region26: #{tpu_custom_call.1} parent=11 // pred_check_branch
          %209 = sbr.rel (%p207) target = $region28
        $region27: #{tpu_custom_call.1} parent=11 // pred_region
          _
        $region28: #{tpu_custom_call.1} parent=11 // pred_fallthru
          _
        // Predicated region
        $region29: #{tpu_custom_call.1} parent=11 // pred_check
          %p210 = pneg %p148
        $region30: #{tpu_custom_call.1} parent=11 // pred_check_branch
          %212 = sbr.rel (%p210) target = $region32
        $region31: #{tpu_custom_call.1} parent=11 // pred_region
          _
        $region32: #{tpu_custom_call.1} parent=11 // pred_fallthru
          _
      $region12: #{tpu_custom_call.1} parent=5 // pred_fallthru
        _
      %p213 = scmp.lt.s32.totalorder %s17, 2
      // Predicated region
      $region33: #{tpu_custom_call.1} parent=5 // pred_check
        %p214 = pneg %p213
      $region34: #{tpu_custom_call.1} parent=5 // pred_check_branch
        %216 = sbr.rel (%p214) target = $region36
      $region35: #{tpu_custom_call.1} parent=5 // pred_region
        // Predicated region
        $region37: #{tpu_custom_call.1} parent=35 // pred_check
          %p217 = pneg %p37
        $region38: #{tpu_custom_call.1} parent=35 // pred_check_branch
          %219 = sbr.rel (%p217) target = $region40
        $region39: #{tpu_custom_call.1} parent=35 // pred_region
          %p220 = scmp.lt.s32.totalorder %s17, 1
          %s221 = scalar_select %p220, %s17, 1
          %s222 = smul.addr %s221, 2
          %s223 = smul.addr %s222, 4
          %s224 = scalar_lea.vmem %s0, %s223
        $region40: #{tpu_custom_call.1} parent=35 // pred_fallthru
          _
      $region36: #{tpu_custom_call.1} parent=5 // pred_fallthru
        _
      %p225 = scmp.le.s32.totalorder 1, %s17
      %p226 = scmp.lt.s32.totalorder %s17, 3
      %p227 = pnand %p225, %p226
      %p228 = pneg %p227
      // Predicated region
      $region41: #{tpu_custom_call.1} parent=5 // pred_check
        _
      $region42: #{tpu_custom_call.1} parent=5 // pred_check_branch
        %230 = sbr.rel (%p227) target = $region44
      $region43: #{tpu_custom_call.1} parent=5 // pred_region
        %s231 = ssub.s32 %s17, 1
        // Predicated region
        $region45: #{tpu_custom_call.1} parent=43 // pred_check
          %p232 = pneg %p85
        $region46: #{tpu_custom_call.1} parent=43 // pred_check_branch
          %234 = sbr.rel (%p232) target = $region48
        $region47: #{tpu_custom_call.1} parent=43 // pred_region
          %236 = dma.done [#allocation4], 16
        $region48: #{tpu_custom_call.1} parent=43 // pred_fallthru
          _
        %p237 = scmp.lt.s32.totalorder %s22, 1
        %s238 = scalar_select %p237, %s22, 1
        %s239 = smul.addr %s238, 2
        %s240 = smul.addr %s239, 4
        %s241 = scalar_lea.vmem %s0, %s240
        %p242 = pneg %p43
        %p243 = pneg %p40
        %p244 = pneg %p64
        %p245 = pneg %p61
        %p246 = pneg %p85
        %p247 = pneg %p82
        %p248 = pneg %p106
        %p249 = pneg %p103
        %p250 = pneg %p127
        %p251 = pneg %p124
        %p252 = pneg %p148
        %p253 = pneg %p145
        %p254 = pneg %p174
        %p255 = pneg %p171
        %s256 = sand.u32 %s161, 1
        %s257 = scalar_lea.sflag [#allocation5], %s256
        %s258 = sand.u32 %s161, 1
        %s259 = smul.addr %s258, 8
        %s260 = scalar_lea.vmem [#allocation6], %s259
        %p261 = scmp.lt.s32.totalorder %s22, 1
        %s262 = scalar_select %p261, %s22, 1
        %s263 = smul.addr %s262, 2
        %s264 = smul.addr %s263, 4
        %s265 = scalar_lea.vmem %s0, %s264
        %v266 = vld [vmem:[%s265] sm:$0xff]
        %268 = vst [vmem:[#allocation1] ss:$2 sm:$0xff] %v266
        %v269 = vld.sshfl [vmem:[#allocation1] sm:$0xff pattern:$0x75316420]
        %v270 = vld.sshfl [vmem:[#allocation1 + $0x8] sm:$0xff pattern:$0x75316420]
        %vm273 = vcmask 1043456
        %v274 = vsel %vm273, %v269, 0.0
        %v275 = vsel %vm273, %v270, 0.0
        %v276 = vadd.f32 %v274, %v275
        %277 = vadd.xlane.f32.xlu0 %v276
        %v278 = vpop.xlane.xlu0 %277
        %v279 = vmul.f32 %v278, 0.00390625
        %v280 = vld [vmem:[%s1] sm:$0xf]
        %v281 = vld [vmem:[#allocation3] sm:$0x1]
        %v283 = vlaneseq
        %v284 = vand.u32 %v283, 127
        %v285 = vperm.slane %v279, %v284
        %vm286 = vcmask 31744
        %v287 = vsel %vm286, %v285, 0
        %v290 = vsel %vm273, %v280, 0
        %292 = vmatpush.msra.mxu0 0.0
        %293 = vmatpush.msra.mxu0 0.0
        %294 = vmatpush.msra.mxu0 0.0
        %295 = vmatpush.msra.mxu0 0.0
        %296 = vmatpush.msra.mxu0 0.0
        %297 = vmatpush.msra.mxu0 0.0
        %298 = vmatpush.msra.mxu0 0.0
        %299 = vmatpush.msra.mxu0 0.0
        %300 = vmatpush.msra.mxu0 0.0
        %301 = vmatpush.msra.mxu0 0.0
        %302 = vmatpush.msra.mxu0 0.0
        %303 = vmatpush.msra.mxu0 0.0
        %304 = vmatpush.msra.mxu0 0.0
        %305 = vmatpush.msra.mxu0 0.0
        %306 = vmatpush.msra.mxu0 0.0
        %307 = vmatpush.msra.mxu0 %v290
        %308 = vmatmul.f32.gmra.mxu0 %v287
        %v309 = vpop.f32.mrf.mxu0
        %v310 = vadd.f32 %v281, %v309
        %311 = vdwg.mxu0
        %s312 = sld [smem:[#allocation2]]
        %vm313 = vcmp.ge.f32.partialorder %v310, 0.0
        %v314 = vstv %s312
        %v315 = vmul.f32 %v314, %v310
        %v316 = vsel %vm313, %v310, %v315
        %v317 = vld [vmem:[%s4] sm:$0xff]
        %v318 = vld [vmem:[%s4 + $0x8] sm:$0xff]
        %v319 = vld [vmem:[%s5] sm:$0x1]
        %vm320 = vcmask 130048
        %v322 = vsel %vm320, %v316, 0
        %324 = vmatpush.msra.mxu0 0.0
        %325 = vmatpush.msra.mxu0 0.0
        %326 = vmatpush.msra.mxu0 0.0
        %327 = vmatpush.msra.mxu0 0.0
        %328 = vmatpush.msra.mxu0 0.0
        %329 = vmatpush.msra.mxu0 0.0
        %330 = vmatpush.msra.mxu0 0.0
        %331 = vmatpush.msra.mxu0 0.0
        %332 = vmatpush.msra.mxu0 0.0
        %333 = vmatpush.msra.mxu0 0.0
        %334 = vmatpush.msra.mxu0 0.0
        %335 = vmatpush.msra.mxu0 0.0
        %336 = vmatpush.msra.mxu0 0.0
        %337 = vmatpush.msra.mxu0 0.0
        %338 = vmatpush.msra.mxu0 %v318
        %339 = vmatpush.msra.mxu0 %v317
        %340 = vmatmul.f32.gmra.mxu0 %v322
        %v341 = vpop.f32.mrf.mxu0
        %v342 = vadd.f32 %v319, %v341
        %343 = vdwg.mxu0
        %v344 = vxor.u32 %v342, 2147483648
        %v345 = vmul.f32 %v344, 1.442695
        %v346 = vpow.pop %v345
        %v347 = vadd.f32 %v346, 1.0
        %v348 = vrcp.pop %v347
        %v349 = vmul.f32 %v347, %v348
        %v350 = vsub.f32 1.0, %v349
        %v351 = vmul.f32 %v348, %v350
        %v352 = vadd.f32 %v348, %v351
        %vm353 = vweird.f32 %v347
        %vm354 = vweird.f32 %v348
        %vm355 = vmor %vm353, %vm354
        %v356 = vsel %vm355, %v348, %v352
        %v357 = vand.u32 2147483647, %v347
        %vm358 = vcmp.eq.f32.partialorder %v357, 8.507059e+37
        %v359 = vand.u32 %v347, 2147483648
        %v360 = vor.u32 1.1754944e-38, %v359
        %v361 = vsel %vm358, %v360, %v356
        %v362 = vmul.f32 1.0, %v361
        %v363 = vperm.slane %v362, 0
        %v364 = vlaneseq
        %v365 = vshrl.u32 %v364, 7
        %367 = vset.pattern.permute.xlu0 %v365
        %368 = vperm.xlu0 %367, %v363
        %v369 = vpop.permute.xlu0 %368
        %v372 = vunpack.c.l.s4 839922192
        %v373 = vunpack.c.0.s8 %v372
        %v374 = vperm.slane %v369, %v373
        %v376 = vmul.f32 %v266, %v374
        %377 = vst [vmem:[%s260] sm:$0xff] %v376
        %s378 = sand.u32 %s161, 1
        %s379 = scalar_lea.sflag [#allocation5], %s378
        %s380 = sand.u32 %s161, 1
        %s381 = smul.addr %s380, 8
        %s382 = scalar_lea.vmem [#allocation6], %s381
        // Predicated region
        $region49: #{tpu_custom_call.1} parent=43 // pred_check
          %p383 = pneg %p171
        $region50: #{tpu_custom_call.1} parent=43 // pred_check_branch
          %385 = sbr.rel (%p383) target = $region52
        $region51: #{tpu_custom_call.1} parent=43 // pred_region
          %387 = vsyncadd %s379, 0
          %s388 = smul.addr %s22, 2
          %s389 = smul.addr %s388, 4
          %s390 = scalar_lea.hbm %s6, %s389
          %s392 = sshll.u32 %s382, 4
          %s393 = int_to_ptr.vmem [resolvable:$true] %s392
          %s394 = sshll.u32 %s390, 4
          %s395 = int_to_ptr.hbm [resolvable:$true] %s394
          %397 = dma.vmem_to_hbm [thread:$0]  %s393, 128, %s395, %s379
        $region52: #{tpu_custom_call.1} parent=43 // pred_fallthru
          _
      $region44: #{tpu_custom_call.1} parent=5 // pred_fallthru
        _
      %p398 = scmp.le.s32.totalorder 2, %s17
      // Predicated region
      $region53: #{tpu_custom_call.1} parent=5 // pred_check
        %p399 = pneg %p398
      $region54: #{tpu_custom_call.1} parent=5 // pred_check_branch
        %401 = sbr.rel (%p399) target = $region56
      $region55: #{tpu_custom_call.1} parent=5 // pred_region
        %s402 = ssub.s32 %s17, 2
        // Predicated region
        $region57: #{tpu_custom_call.1} parent=55 // pred_check
          %p403 = pneg %p177
        $region58: #{tpu_custom_call.1} parent=55 // pred_check_branch
          %405 = sbr.rel (%p403) target = $region60
        $region59: #{tpu_custom_call.1} parent=55 // pred_region
          %s406 = sand.u32 %s162, 1
          %s407 = scalar_lea.sflag [#allocation5], %s406
          %s408 = sand.u32 %s162, 1
          %s409 = smul.addr %s408, 8
          %s410 = scalar_lea.vmem [#allocation6], %s409
          %412 = dma.done %s407, 128
        $region60: #{tpu_custom_call.1} parent=55 // pred_fallthru
          _
      $region56: #{tpu_custom_call.1} parent=5 // pred_fallthru
        _
    $region6: #{tpu_custom_call.1} parent=1 // loop_footer
      %s21 = sadd.s32 1, %s17
    $region7: #{tpu_custom_call.1} parent=1 // loop_footer_branch
      %16 = sbr.rel target = $region3
    $region8: #{tpu_custom_call.1} parent=1 // loop_exit
      _
    %413 = vsyncpa [#allocation4], 1
    %s414 = scalar_lea.sflag [#allocation4], 1
    %415 = vsyncpa %s414, 1
    %416 = vsyncpa [#allocation5], 1
    %s417 = scalar_lea.sflag [#allocation5], 1
    %418 = vsyncpa %s417, 1

</llo_original>
